<compile_context>
chip_gen: v7x
topology: tpu7x:2x2x1
jax: 0.10.0
libtpu: 0.0.40
codegen_flags: <defaults>
</compile_context>

<pallas_src>
import jax
import jax.numpy as jnp
from jax.experimental import pallas as pl
from jax.experimental.pallas import tpu as pltpu


def _se_gate_kernel(gate_ref, x_ref, o_ref):
    # gate_ref: (TM, 1), x_ref / o_ref: (TM, HW)
    g = gate_ref[...].astype(jnp.float32)        # tiny per-channel gate, f32 math
    s = 1.0 / (1.0 + jnp.exp(-g))                # exact sigmoid: exp on EUP
    x = x_ref[...]                               # keep native dtype (bf16 stays bf16)
    o_ref[...] = (x * s.astype(x.dtype)).astype(o_ref.dtype)   # broadcast over lanes


def _choose_tile_rows(nc, hw, itemsize, *, min_steps=8,
                      vmem_block_budget=2 * 1024 * 1024):
    """Pick the row-tile: dtype-aligned, fits the per-block VMEM budget (with
    lane padding to 128), and yields >= min_steps grid steps so the DMA pipeline
    has a steady state (and both v7x TensorCores get real work). The last grid
    block may be ragged; Pallas masks it."""
    # Sublane packing: f32 -> 8 rows, bf16 -> 16, int8/fp8 -> 32.
    align = max(8, 32 // max(1, itemsize))
    if nc <= align:
        return nc
    hw_padded = -(-hw // 128) * 128                      # VMEM lane padding
    max_rows = vmem_block_budget // max(1, hw_padded * itemsize)
    max_rows = max(align, max_rows - max_rows % align)
    want = -(-nc // min_steps)                           # rows/step for ~min_steps steps
    want = -(-want // align) * align                     # round up to alignment
    return max(align, min(nc, max_rows, want))


def se_gate(x346, x342, *, tile_rows=None):
    """sigmoid(x346) * x342 with NCHW broadcasting, matching the PyTorch module.

    x346: (N, C, 1, 1), x342: (N, C, H, W). Returns (N, C, H, W) in x342.dtype.
    """
    N, C, H, W = x342.shape
    assert x346.shape == (N, C, 1, 1)
    NC, HW = N * C, H * W
    out_dtype = x342.dtype
    itemsize = jnp.dtype(out_dtype).itemsize

    gate2d = x346.reshape(NC, 1)
    x2d = x342.reshape(NC, HW)

    tm = tile_rows if tile_rows is not None else _choose_tile_rows(NC, HW, itemsize)
    grid = (pl.cdiv(NC, tm),)

    # Purely HBM-bandwidth bound: read x + gate, write out, 1 mul/elem + sigmoid/channel.
    cost = pl.CostEstimate(
        flops=2 * NC * HW + 4 * NC,
        transcendentals=NC,
        bytes_accessed=2 * NC * HW * itemsize + NC * jnp.dtype(gate2d.dtype).itemsize,
    )

    out2d = pl.pallas_call(
        _se_gate_kernel,
        out_shape=jax.ShapeDtypeStruct((NC, HW), out_dtype),
        grid=grid,
        in_specs=[
            pl.BlockSpec((tm, 1), lambda i: (i, 0)),     # per-channel gate
            pl.BlockSpec((tm, HW), lambda i: (i, 0)),    # activation tile
        ],
        out_specs=pl.BlockSpec((tm, HW), lambda i: (i, 0)),
        compiler_params=pltpu.CompilerParams(
            # Independent row tiles -> shardable across TensorCores on 2-TC parts.
            dimension_semantics=("parallel",),
        ),
        cost_estimate=cost,
    )(gate2d, x2d)

    return out2d.reshape(N, C, H, W)


if __name__ == "__main__":
    key = jax.random.PRNGKey(0)
    k1, k2 = jax.random.split(key)

    # Shapes from the PyTorch module: x342 (1,1056,14,14), x346 (1,1056,1,1)
    N, C, H, W = 1, 1056, 14, 14
    x342 = jax.random.normal(k1, (N, C, H, W), dtype=jnp.float32)
    x346 = jax.random.normal(k2, (N, C, 1, 1), dtype=jnp.float32)

    out = jax.block_until_ready(se_gate(x346, x342))

    # Reference check in plain JAX
    ref = jax.nn.sigmoid(x346) * x342
    assert out.shape == (N, C, H, W)
    assert out.dtype == x342.dtype
    assert jnp.allclose(out, ref, atol=1e-5, rtol=1e-5)

    print("KERNEL_OK")
</pallas_src>

<mosaic_0001>
module attributes {stable_mosaic.version = 11 : i64} {
  func.func @_se_gate_kernel(%arg0: i32, %arg1: memref<136x1xf32, #tpu.memory_space<vmem>>, %arg2: memref<136x196xf32, #tpu.memory_space<vmem>>, %arg3: memref<136x196xf32, #tpu.memory_space<vmem>>) attributes {dimension_semantics = [#tpu.dimension_semantics<parallel>], iteration_bounds = array<i64: 8>, scalar_prefetch = 0 : i64, scratch_operands = 0 : i64, tpu.core_type = #tpu.core_type<tc>, window_params = [{transform_indices = @transform_0, window_bounds = array<i64: 136, 1>}, {transform_indices = @transform_1, window_bounds = array<i64: 136, 196>}, {transform_indices = @transform_2, window_bounds = array<i64: 136, 196>}]} {
    %c0 = arith.constant 0 : index
    %c0_0 = arith.constant 0 : index
    %0 = vector.load %arg1[%c0, %c0_0] : memref<136x1xf32, #tpu.memory_space<vmem>>, vector<136x1xf32>
    %cst = arith.constant 0.000000e+00 : f32
    %1 = vector.broadcast %cst : f32 to vector<136x1xf32>
    %2 = arith.subf %1, %0 : vector<136x1xf32>
    %3 = math.exp %2 : vector<136x1xf32>
    %cst_1 = arith.constant 1.000000e+00 : f32
    %4 = vector.broadcast %cst_1 : f32 to vector<136x1xf32>
    %5 = arith.addf %4, %3 : vector<136x1xf32>
    %cst_2 = arith.constant 1.000000e+00 : f32
    %6 = vector.broadcast %cst_2 : f32 to vector<136x1xf32>
    %7 = arith.divf %6, %5 : vector<136x1xf32>
    %c0_3 = arith.constant 0 : index
    %c0_4 = arith.constant 0 : index
    %8 = vector.load %arg2[%c0_3, %c0_4] : memref<136x196xf32, #tpu.memory_space<vmem>>, vector<136x196xf32>
    %9 = vector.broadcast %7 : vector<136x1xf32> to vector<136x196xf32>
    %10 = arith.mulf %8, %9 : vector<136x196xf32>
    %c0_5 = arith.constant 0 : index
    %c0_6 = arith.constant 0 : index
    %11 = vector.load %arg3[%c0_5, %c0_6] : memref<136x196xf32, #tpu.memory_space<vmem>>, vector<136x196xf32>
    tpu.vector_store %arg3[%c0_5, %c0_6], %10 {strides = array<i32>} : memref<136x196xf32, #tpu.memory_space<vmem>>, vector<136x196xf32>,
    return
  }
  func.func @transform_0(%arg0: i32) -> (i32, i32) {
    %c0_i32 = arith.constant 0 : i32
    %c0_i32_0 = arith.constant 0 : i32
    return %arg0, %c0_i32 : i32, i32
  }
  func.func @transform_1(%arg0: i32) -> (i32, i32) {
    %c0_i32 = arith.constant 0 : i32
    %c0_i32_0 = arith.constant 0 : i32
    return %arg0, %c0_i32 : i32, i32
  }
  func.func @transform_2(%arg0: i32) -> (i32, i32) {
    %c0_i32 = arith.constant 0 : i32
    %c0_i32_0 = arith.constant 0 : i32
    return %arg0, %c0_i32 : i32, i32
  }
}

</mosaic_0001>

<llo_original>
// kernel: tpu_custom_call.1
$region0: #{tpu_custom_call.1}
  #allocation0 [shape = 'u32[]', space=smem, size = 0x4, offset = 0x4, fixed_abs, tag = 'smem constant byte address 0x4 - core index']
  #allocation1 [shape = 'u32[144,128]{1,0:T(1,128)}', space=vmem, size = 0x12000, scoped, tag = 'internal scratch']
  %s0 = inlined_call_operand.vmem [shape: f32[1056,1], index: 0, kind: input, shape index: {}]
  %s1 = inlined_call_operand.vmem [shape: f32[1056,196], index: 1, kind: input, shape index: {}]
  %s2 = inlined_call_operand.vmem [shape: f32[1056,196], index: 2, kind: output, shape index: {}]
  %s3 = sld [smem:[#allocation0]]
  $region67: #{tpu_custom_call.1} parent=0
    _
  %s5 = ssub.s32 1, %s3
  %s6 = scalar_select 0, %s5, %s3
  $region1: #{tpu_custom_call.1} parent=0
    #allocation2 [shape = 'u8[278528]{0}', space=vmem, size = 0x44000, scoped, tag = 'output window, operand 0']
    loop: start=0, step=1, limit=10
    $region2: #{tpu_custom_call.1} parent=1 // loop_pre_header
      _
    $region3: #{tpu_custom_call.1} parent=1 // loop_header
      %s8 = sphi 0, %s12
      %p9 = scmp.ge.s32.totalorder %s8, 10
      %s18 = sphi 0, %s20
      %s21 = sphi 0, %s18
      %s22 = sphi 0, %s21
      %s38 = sphi 0, %s22
      %s44 = sphi 0, %s46
      %s47 = sphi 0, %s44
      %s48 = sphi 0, %s47
      %s64 = sphi 0, %s48
      %s70 = sphi 0, %s72
      %s73 = sphi 0, %s70
      %s74 = sphi 0, %s73
      %s90 = sphi 0, %s74
    $region4: #{tpu_custom_call.1} parent=1 // loop_header_branch
      %11 = sbr.rel (%p9) target = $region8
    $region5: #{tpu_custom_call.1} parent=1 // loop_body
      %s13 = ssub.s32 %s8, 1
      %s14 = ssub.s32 %s8, 2
      %s15 = sadd.s32 %s8, 1
      %s16 = ssub.s32 %s8, %s15
      %p17 = scmp.eq.s32.totalorder %s16, 0
      %s19 = sadd.s32 %s18, 1
      %s20 = scalar_select %p17, %s18, %s19
      %p23 = pneg %p17
      %p24 = scmp.eq.s32.totalorder %s8, 7
      %p25 = por %p23, %p24
      %p26 = scmp.ne.s32.totalorder %s18, %s21
      %p27 = scmp.eq.s32.totalorder %s8, 0
      %p28 = por %p26, %p27
      %p29 = scmp.ne.s32.totalorder %s18, %s21
      %p30 = scmp.eq.s32.totalorder %s13, 7
      %p31 = por %p29, %p30
      %p32 = scmp.ne.s32.totalorder %s21, %s22
      %p33 = scmp.eq.s32.totalorder %s13, 0
      %p34 = por %p32, %p33
      %p35 = scmp.ne.s32.totalorder %s21, %s22
      %p36 = scmp.eq.s32.totalorder %s14, 7
      %p37 = por %p35, %p36
      %p39 = scmp.ne.s32.totalorder %s22, %s38
      %p40 = scmp.eq.s32.totalorder %s14, 0
      %p41 = por %p39, %p40
      %s42 = ssub.s32 %s8, %s15
      %p43 = scmp.eq.s32.totalorder %s42, 0
      %s45 = sadd.s32 %s44, 1
      %s46 = scalar_select %p43, %s44, %s45
      %p49 = pneg %p43
      %p50 = scmp.eq.s32.totalorder %s8, 7
      %p51 = por %p49, %p50
      %p52 = scmp.ne.s32.totalorder %s44, %s47
      %p53 = scmp.eq.s32.totalorder %s8, 0
      %p54 = por %p52, %p53
      %p55 = scmp.ne.s32.totalorder %s44, %s47
      %p56 = scmp.eq.s32.totalorder %s13, 7
      %p57 = por %p55, %p56
      %p58 = scmp.ne.s32.totalorder %s47, %s48
      %p59 = scmp.eq.s32.totalorder %s13, 0
      %p60 = por %p58, %p59
      %p61 = scmp.ne.s32.totalorder %s47, %s48
      %p62 = scmp.eq.s32.totalorder %s14, 7
      %p63 = por %p61, %p62
      %p65 = scmp.ne.s32.totalorder %s48, %s64
      %p66 = scmp.eq.s32.totalorder %s14, 0
      %p67 = por %p65, %p66
      %s68 = ssub.s32 %s8, %s15
      %p69 = scmp.eq.s32.totalorder %s68, 0
      %s71 = sadd.s32 %s70, 1
      %s72 = scalar_select %p69, %s70, %s71
      %p75 = pneg %p69
      %p76 = scmp.eq.s32.totalorder %s8, 7
      %p77 = por %p75, %p76
      %p78 = scmp.ne.s32.totalorder %s70, %s73
      %p79 = scmp.eq.s32.totalorder %s8, 0
      %p80 = por %p78, %p79
      %p81 = scmp.ne.s32.totalorder %s70, %s73
      %p82 = scmp.eq.s32.totalorder %s13, 7
      %p83 = por %p81, %p82
      %p84 = scmp.ne.s32.totalorder %s73, %s74
      %p85 = scmp.eq.s32.totalorder %s13, 0
      %p86 = por %p84, %p85
      %p87 = scmp.ne.s32.totalorder %s73, %s74
      %p88 = scmp.eq.s32.totalorder %s14, 7
      %p89 = por %p87, %p88
      %p91 = scmp.ne.s32.totalorder %s74, %s90
      %p92 = scmp.eq.s32.totalorder %s14, 0
      %p93 = por %p91, %p92
      %p94 = scmp.le.s32.totalorder 1, %s8
      %p95 = scmp.lt.s32.totalorder %s8, 9
      %p96 = pnand %p94, %p95
      %p97 = pneg %p96
      // Predicated region
      $region9: #{tpu_custom_call.1} parent=5 // pred_check
        _
      $region10: #{tpu_custom_call.1} parent=5 // pred_check_branch
        %99 = sbr.rel (%p96) target = $region12
      $region11: #{tpu_custom_call.1} parent=5 // pred_region
        %s100 = ssub.s32 %s8, 1
      $region12: #{tpu_custom_call.1} parent=5 // pred_fallthru
        _
      %p101 = scmp.lt.s32.totalorder %s8, 8
      // Predicated region
      $region13: #{tpu_custom_call.1} parent=5 // pred_check
        %p102 = pneg %p101
      $region14: #{tpu_custom_call.1} parent=5 // pred_check_branch
        %104 = sbr.rel (%p102) target = $region16
      $region15: #{tpu_custom_call.1} parent=5 // pred_region
        // Predicated region
        $region17: #{tpu_custom_call.1} parent=15 // pred_check
          %p105 = pneg %p28
        $region18: #{tpu_custom_call.1} parent=15 // pred_check_branch
          %107 = sbr.rel (%p105) target = $region20
        $region19: #{tpu_custom_call.1} parent=15 // pred_region
          %s108 = smul.u32 17, %s8
          %s109 = ssub.s32 132, %s108
          %p110 = scmp.lt.s32.totalorder %s109, 17
          %s111 = scalar_select %p110, %s109, 17
          %s112 = smul.u32 128, %s111
          %p113 = scmp.lt.s32.totalorder %s108, 131
          %s114 = scalar_select %p113, %s108, 131
          %s115 = smul.addr %s114, 8
          %s116 = scalar_lea.vmem %s0, %s115
          %s117 = smul.u32 17, %s8
          %s118 = ssub.s32 132, %s117
          %p119 = scmp.lt.s32.totalorder %s118, 17
          %s120 = scalar_select %p119, %s118, 17
          %s121 = smul.u32 128, %s120
        $region20: #{tpu_custom_call.1} parent=15 // pred_fallthru
          _
        // Predicated region
        $region21: #{tpu_custom_call.1} parent=15 // pred_check
          %p122 = pneg %p54
        $region22: #{tpu_custom_call.1} parent=15 // pred_check_branch
          %124 = sbr.rel (%p122) target = $region24
        $region23: #{tpu_custom_call.1} parent=15 // pred_region
          %s125 = smul.u32 17, %s8
          %s126 = ssub.s32 132, %s125
          %p127 = scmp.lt.s32.totalorder %s126, 17
          %s128 = scalar_select %p127, %s126, 17
          %s129 = smul.u32 128, %s128
          %s130 = smul.u32 %s129, 2
          %p131 = scmp.lt.s32.totalorder %s125, 131
          %s132 = scalar_select %p131, %s125, 131
          %s133 = smul.addr %s132, 2
          %s134 = smul.addr %s133, 8
          %s135 = scalar_lea.vmem %s1, %s134
          %s136 = smul.u32 17, %s8
          %s137 = ssub.s32 132, %s136
          %p138 = scmp.lt.s32.totalorder %s137, 17
          %s139 = scalar_select %p138, %s137, 17
          %s140 = smul.u32 128, %s139
          %s141 = smul.u32 %s140, 2
        $region24: #{tpu_custom_call.1} parent=15 // pred_fallthru
          _
      $region16: #{tpu_custom_call.1} parent=5 // pred_fallthru
        _
      %p142 = scmp.le.s32.totalorder 1, %s8
      %p143 = scmp.lt.s32.totalorder %s8, 9
      %p144 = pnand %p142, %p143
      %p145 = pneg %p144
      // Predicated region
      $region25: #{tpu_custom_call.1} parent=5 // pred_check
        _
      $region26: #{tpu_custom_call.1} parent=5 // pred_check_branch
        %147 = sbr.rel (%p144) target = $region28
      $region27: #{tpu_custom_call.1} parent=5 // pred_region
        %s148 = ssub.s32 %s8, 1
        %s149 = smul.u32 17, %s13
        %s150 = ssub.s32 132, %s149
        %p151 = scmp.lt.s32.totalorder %s150, 17
        %s152 = scalar_select %p151, %s150, 17
        %s153 = smul.u32 128, %s152
        %p154 = scmp.lt.s32.totalorder %s149, 131
        %s155 = scalar_select %p154, %s149, 131
        %s156 = smul.addr %s155, 8
        %s157 = scalar_lea.vmem %s0, %s156
        %p158 = pneg %p34
        %p159 = pneg %p31
        %s160 = smul.u32 17, %s13
        %s161 = ssub.s32 132, %s160
        %p162 = scmp.lt.s32.totalorder %s161, 17
        %s163 = scalar_select %p162, %s161, 17
        %s164 = smul.u32 128, %s163
        %s165 = smul.u32 %s164, 2
        %p166 = scmp.lt.s32.totalorder %s160, 131
        %s167 = scalar_select %p166, %s160, 131
        %s168 = smul.addr %s167, 2
        %s169 = smul.addr %s168, 8
        %s170 = scalar_lea.vmem %s1, %s169
        %p171 = pneg %p60
        %p172 = pneg %p57
        %p173 = pneg %p86
        %p174 = pneg %p83
        %s175 = sand.u32 %s73, 1
        %s176 = sand.u32 %s73, 1
        %s177 = smul.addr %s176, 272
        %s178 = scalar_lea.vmem [#allocation2], %s177
        %s179 = smul.u32 17, %s13
        %s180 = ssub.s32 132, %s179
        %p181 = scmp.lt.s32.totalorder %s180, 17
        %s182 = scalar_select %p181, %s180, 17
        %s183 = smul.u32 128, %s182
        %p184 = scmp.lt.s32.totalorder %s179, 131
        %s185 = scalar_select %p184, %s179, 131
        %s186 = smul.addr %s185, 8
        %s187 = scalar_lea.vmem %s0, %s186
        %s188 = smul.u32 17, %s13
        %s189 = ssub.s32 132, %s188
        %p190 = scmp.lt.s32.totalorder %s189, 17
        %s191 = scalar_select %p190, %s189, 17
        %s192 = smul.u32 128, %s191
        %s193 = smul.u32 17, %s13
        %s194 = ssub.s32 132, %s193
        %p195 = scmp.lt.s32.totalorder %s194, 17
        %s196 = scalar_select %p195, %s194, 17
        %s197 = smul.u32 128, %s196
        %s198 = smul.u32 %s197, 2
        %p199 = scmp.lt.s32.totalorder %s193, 131
        %s200 = scalar_select %p199, %s193, 131
        %s201 = smul.addr %s200, 2
        %s202 = smul.addr %s201, 8
        %s203 = scalar_lea.vmem %s1, %s202
        %s204 = smul.u32 17, %s13
        %s205 = ssub.s32 132, %s204
        %p206 = scmp.lt.s32.totalorder %s205, 17
        %s207 = scalar_select %p206, %s205, 17
        %s208 = smul.u32 128, %s207
        %s209 = smul.u32 %s208, 2
        %s210 = smul.u32 17, %s13
        %s211 = ssub.s32 132, %s210
        %p212 = scmp.lt.s32.totalorder %s211, 17
        %s213 = scalar_select %p212, %s211, 17
        %s214 = smul.u32 128, %s213
        %s215 = smul.u32 %s214, 2
        %v216 = vld [vmem:[%s187] sm:$0xff]
        %v217 = vld [vmem:[%s187 + $0x8] sm:$0xff]
        %v218 = vld [vmem:[%s187 + $0x10] sm:$0xff]
        %v219 = vld [vmem:[%s187 + $0x18] sm:$0xff]
        %v220 = vld [vmem:[%s187 + $0x20] sm:$0xff]
        %v221 = vld [vmem:[%s187 + $0x28] sm:$0xff]
        %v222 = vld [vmem:[%s187 + $0x30] sm:$0xff]
        %v223 = vld [vmem:[%s187 + $0x38] sm:$0xff]
        %v224 = vld [vmem:[%s187 + $0x40] sm:$0xff]
        %v225 = vld [vmem:[%s187 + $0x48] sm:$0xff]
        %v226 = vld [vmem:[%s187 + $0x50] sm:$0xff]
        %v227 = vld [vmem:[%s187 + $0x58] sm:$0xff]
        %v228 = vld [vmem:[%s187 + $0x60] sm:$0xff]
        %v229 = vld [vmem:[%s187 + $0x68] sm:$0xff]
        %v230 = vld [vmem:[%s187 + $0x70] sm:$0xff]
        %v231 = vld [vmem:[%s187 + $0x78] sm:$0xff]
        %v232 = vld [vmem:[%s187 + $0x80] sm:$0xff]
        %v233 = vsub.f32 0.0, %v216
        %v234 = vsub.f32 0.0, %v217
        %v235 = vsub.f32 0.0, %v218
        %v236 = vsub.f32 0.0, %v219
        %v237 = vsub.f32 0.0, %v220
        %v238 = vsub.f32 0.0, %v221
        %v239 = vsub.f32 0.0, %v222
        %v240 = vsub.f32 0.0, %v223
        %v241 = vsub.f32 0.0, %v224
        %v242 = vsub.f32 0.0, %v225
        %v243 = vsub.f32 0.0, %v226
        %v244 = vsub.f32 0.0, %v227
        %v245 = vsub.f32 0.0, %v228
        %v246 = vsub.f32 0.0, %v229
        %v247 = vsub.f32 0.0, %v230
        %v248 = vsub.f32 0.0, %v231
        %v249 = vsub.f32 0.0, %v232
        %v250 = vmul.f32 %v233, 1.442695
        %v251 = vpow.pop %v250
        %v252 = vmul.f32 %v234, 1.442695
        %v253 = vpow.pop %v252
        %v254 = vmul.f32 %v235, 1.442695
        %v255 = vpow.pop %v254
        %v256 = vmul.f32 %v236, 1.442695
        %v257 = vpow.pop %v256
        %v258 = vmul.f32 %v237, 1.442695
        %v259 = vpow.pop %v258
        %v260 = vmul.f32 %v238, 1.442695
        %v261 = vpow.pop %v260
        %v262 = vmul.f32 %v239, 1.442695
        %v263 = vpow.pop %v262
        %v264 = vmul.f32 %v240, 1.442695
        %v265 = vpow.pop %v264
        %v266 = vmul.f32 %v241, 1.442695
        %v267 = vpow.pop %v266
        %v268 = vmul.f32 %v242, 1.442695
        %v269 = vpow.pop %v268
        %v270 = vmul.f32 %v243, 1.442695
        %v271 = vpow.pop %v270
        %v272 = vmul.f32 %v244, 1.442695
        %v273 = vpow.pop %v272
        %v274 = vmul.f32 %v245, 1.442695
        %v275 = vpow.pop %v274
        %v276 = vmul.f32 %v246, 1.442695
        %v277 = vpow.pop %v276
        %v278 = vmul.f32 %v247, 1.442695
        %v279 = vpow.pop %v278
        %v280 = vmul.f32 %v248, 1.442695
        %v281 = vpow.pop %v280
        %v282 = vmul.f32 %v249, 1.442695
        %v283 = vpow.pop %v282
        %v284 = vadd.f32 %v251, 1.0
        %v285 = vadd.f32 %v253, 1.0
        %v286 = vadd.f32 %v255, 1.0
        %v287 = vadd.f32 %v257, 1.0
        %v288 = vadd.f32 %v259, 1.0
        %v289 = vadd.f32 %v261, 1.0
        %v290 = vadd.f32 %v263, 1.0
        %v291 = vadd.f32 %v265, 1.0
        %v292 = vadd.f32 %v267, 1.0
        %v293 = vadd.f32 %v269, 1.0
        %v294 = vadd.f32 %v271, 1.0
        %v295 = vadd.f32 %v273, 1.0
        %v296 = vadd.f32 %v275, 1.0
        %v297 = vadd.f32 %v277, 1.0
        %v298 = vadd.f32 %v279, 1.0
        %v299 = vadd.f32 %v281, 1.0
        %v300 = vadd.f32 %v283, 1.0
        %v301 = vrcp.pop %v284
        %v302 = vmul.f32 1.0, %v301
        %v303 = vrcp.pop %v285
        %v304 = vmul.f32 1.0, %v303
        %v305 = vrcp.pop %v286
        %v306 = vmul.f32 1.0, %v305
        %v307 = vrcp.pop %v287
        %v308 = vmul.f32 1.0, %v307
        %v309 = vrcp.pop %v288
        %v310 = vmul.f32 1.0, %v309
        %v311 = vrcp.pop %v289
        %v312 = vmul.f32 1.0, %v311
        %v313 = vrcp.pop %v290
        %v314 = vmul.f32 1.0, %v313
        %v315 = vrcp.pop %v291
        %v316 = vmul.f32 1.0, %v315
        %v317 = vrcp.pop %v292
        %v318 = vmul.f32 1.0, %v317
        %v319 = vrcp.pop %v293
        %v320 = vmul.f32 1.0, %v319
        %v321 = vrcp.pop %v294
        %v322 = vmul.f32 1.0, %v321
        %v323 = vrcp.pop %v295
        %v324 = vmul.f32 1.0, %v323
        %v325 = vrcp.pop %v296
        %v326 = vmul.f32 1.0, %v325
        %v327 = vrcp.pop %v297
        %v328 = vmul.f32 1.0, %v327
        %v329 = vrcp.pop %v298
        %v330 = vmul.f32 1.0, %v329
        %v331 = vrcp.pop %v299
        %v332 = vmul.f32 1.0, %v331
        %v333 = vrcp.pop %v300
        %v334 = vmul.f32 1.0, %v333
        %v335 = vld [vmem:[%s203] sm:$0xff]
        %v336 = vld [vmem:[%s203 + $0x8] sm:$0xff]
        %v337 = vld [vmem:[%s203 + $0x10] sm:$0xff]
        %v338 = vld [vmem:[%s203 + $0x18] sm:$0xff]
        %v339 = vld [vmem:[%s203 + $0x20] sm:$0xff]
        %v340 = vld [vmem:[%s203 + $0x28] sm:$0xff]
        %v341 = vld [vmem:[%s203 + $0x30] sm:$0xff]
        %v342 = vld [vmem:[%s203 + $0x38] sm:$0xff]
        %v343 = vld [vmem:[%s203 + $0x40] sm:$0xff]
        %v344 = vld [vmem:[%s203 + $0x48] sm:$0xff]
        %v345 = vld [vmem:[%s203 + $0x50] sm:$0xff]
        %v346 = vld [vmem:[%s203 + $0x58] sm:$0xff]
        %v347 = vld [vmem:[%s203 + $0x60] sm:$0xff]
        %v348 = vld [vmem:[%s203 + $0x68] sm:$0xff]
        %v349 = vld [vmem:[%s203 + $0x70] sm:$0xff]
        %v350 = vld [vmem:[%s203 + $0x78] sm:$0xff]
        %v351 = vld [vmem:[%s203 + $0x80] sm:$0xff]
        %v352 = vld [vmem:[%s203 + $0x88] sm:$0xff]
        %v353 = vld [vmem:[%s203 + $0x90] sm:$0xff]
        %v354 = vld [vmem:[%s203 + $0x98] sm:$0xff]
        %v355 = vld [vmem:[%s203 + $0xa0] sm:$0xff]
        %v356 = vld [vmem:[%s203 + $0xa8] sm:$0xff]
        %v357 = vld [vmem:[%s203 + $0xb0] sm:$0xff]
        %v358 = vld [vmem:[%s203 + $0xb8] sm:$0xff]
        %v359 = vld [vmem:[%s203 + $0xc0] sm:$0xff]
        %v360 = vld [vmem:[%s203 + $0xc8] sm:$0xff]
        %v361 = vld [vmem:[%s203 + $0xd0] sm:$0xff]
        %v362 = vld [vmem:[%s203 + $0xd8] sm:$0xff]
        %v363 = vld [vmem:[%s203 + $0xe0] sm:$0xff]
        %v364 = vld [vmem:[%s203 + $0xe8] sm:$0xff]
        %v365 = vld [vmem:[%s203 + $0xf0] sm:$0xff]
        %v366 = vld [vmem:[%s203 + $0xf8] sm:$0xff]
        %v367 = vld [vmem:[%s203 + $0x100] sm:$0xff]
        %v368 = vld [vmem:[%s203 + $0x108] sm:$0xff]
        %370 = vset.pattern.permute.xlu0 0
        %371 = vperm.xlu0 %370, %v302
        %v372 = vpop.permute.xlu0 %371
        %375 = vset.pattern.permute.xlu0 0
        %376 = vperm.xlu0 %375, %v304
        %v377 = vpop.permute.xlu0 %376
        %380 = vset.pattern.permute.xlu0 0
        %381 = vperm.xlu0 %380, %v306
        %v382 = vpop.permute.xlu0 %381
        %385 = vset.pattern.permute.xlu0 0
        %386 = vperm.xlu0 %385, %v308
        %v387 = vpop.permute.xlu0 %386
        %390 = vset.pattern.permute.xlu0 0
        %391 = vperm.xlu0 %390, %v310
        %v392 = vpop.permute.xlu0 %391
        %395 = vset.pattern.permute.xlu0 0
        %396 = vperm.xlu0 %395, %v312
        %v397 = vpop.permute.xlu0 %396
        %400 = vset.pattern.permute.xlu0 0
        %401 = vperm.xlu0 %400, %v314
        %v402 = vpop.permute.xlu0 %401
        %405 = vset.pattern.permute.xlu0 0
        %406 = vperm.xlu0 %405, %v316
        %v407 = vpop.permute.xlu0 %406
        %410 = vset.pattern.permute.xlu0 0
        %411 = vperm.xlu0 %410, %v318
        %v412 = vpop.permute.xlu0 %411
        %415 = vset.pattern.permute.xlu0 0
        %416 = vperm.xlu0 %415, %v320
        %v417 = vpop.permute.xlu0 %416
        %420 = vset.pattern.permute.xlu0 0
        %421 = vperm.xlu0 %420, %v322
        %v422 = vpop.permute.xlu0 %421
        %425 = vset.pattern.permute.xlu0 0
        %426 = vperm.xlu0 %425, %v324
        %v427 = vpop.permute.xlu0 %426
        %430 = vset.pattern.permute.xlu0 0
        %431 = vperm.xlu0 %430, %v326
        %v432 = vpop.permute.xlu0 %431
        %435 = vset.pattern.permute.xlu0 0
        %436 = vperm.xlu0 %435, %v328
        %v437 = vpop.permute.xlu0 %436
        %440 = vset.pattern.permute.xlu0 0
        %441 = vperm.xlu0 %440, %v330
        %v442 = vpop.permute.xlu0 %441
        %445 = vset.pattern.permute.xlu0 0
        %446 = vperm.xlu0 %445, %v332
        %v447 = vpop.permute.xlu0 %446
        %450 = vset.pattern.permute.xlu0 0
        %451 = vperm.xlu0 %450, %v334
        %v452 = vpop.permute.xlu0 %451
        %v454 = vmul.f32 %v335, %v372
        %v455 = vmul.f32 %v336, %v372
        %v456 = vmul.f32 %v337, %v377
        %v457 = vmul.f32 %v338, %v377
        %v458 = vmul.f32 %v339, %v382
        %v459 = vmul.f32 %v340, %v382
        %v460 = vmul.f32 %v341, %v387
        %v461 = vmul.f32 %v342, %v387
        %v462 = vmul.f32 %v343, %v392
        %v463 = vmul.f32 %v344, %v392
        %v464 = vmul.f32 %v345, %v397
        %v465 = vmul.f32 %v346, %v397
        %v466 = vmul.f32 %v347, %v402
        %v467 = vmul.f32 %v348, %v402
        %v468 = vmul.f32 %v349, %v407
        %v469 = vmul.f32 %v350, %v407
        %v470 = vmul.f32 %v351, %v412
        %v471 = vmul.f32 %v352, %v412
        %v472 = vmul.f32 %v353, %v417
        %v473 = vmul.f32 %v354, %v417
        %v474 = vmul.f32 %v355, %v422
        %v475 = vmul.f32 %v356, %v422
        %v476 = vmul.f32 %v357, %v427
        %v477 = vmul.f32 %v358, %v427
        %v478 = vmul.f32 %v359, %v432
        %v479 = vmul.f32 %v360, %v432
        %v480 = vmul.f32 %v361, %v437
        %v481 = vmul.f32 %v362, %v437
        %v482 = vmul.f32 %v363, %v442
        %v483 = vmul.f32 %v364, %v442
        %v484 = vmul.f32 %v365, %v447
        %v485 = vmul.f32 %v366, %v447
        %v486 = vmul.f32 %v367, %v452
        %v487 = vmul.f32 %v368, %v452
        %488 = vst [vmem:[%s178] sm:$0xff] %v454
        %vm489 = vcmask 556032
        %490 = vst.msk [vmem:[%s178 + $0x8] sm:$0xff] %vm489, %v455
        %491 = vst [vmem:[%s178 + $0x10] sm:$0xff] %v456
        %492 = vst.msk [vmem:[%s178 + $0x18] sm:$0xff] %vm489, %v457
        %493 = vst [vmem:[%s178 + $0x20] sm:$0xff] %v458
        %494 = vst.msk [vmem:[%s178 + $0x28] sm:$0xff] %vm489, %v459
        %495 = vst [vmem:[%s178 + $0x30] sm:$0xff] %v460
        %496 = vst.msk [vmem:[%s178 + $0x38] sm:$0xff] %vm489, %v461
        %497 = vst [vmem:[%s178 + $0x40] sm:$0xff] %v462
        %498 = vst.msk [vmem:[%s178 + $0x48] sm:$0xff] %vm489, %v463
        %499 = vst [vmem:[%s178 + $0x50] sm:$0xff] %v464
        %500 = vst.msk [vmem:[%s178 + $0x58] sm:$0xff] %vm489, %v465
        %501 = vst [vmem:[%s178 + $0x60] sm:$0xff] %v466
        %502 = vst.msk [vmem:[%s178 + $0x68] sm:$0xff] %vm489, %v467
        %503 = vst [vmem:[%s178 + $0x70] sm:$0xff] %v468
        %504 = vst.msk [vmem:[%s178 + $0x78] sm:$0xff] %vm489, %v469
        %505 = vst [vmem:[%s178 + $0x80] sm:$0xff] %v470
        %506 = vst.msk [vmem:[%s178 + $0x88] sm:$0xff] %vm489, %v471
        %507 = vst [vmem:[%s178 + $0x90] sm:$0xff] %v472
        %508 = vst.msk [vmem:[%s178 + $0x98] sm:$0xff] %vm489, %v473
        %509 = vst [vmem:[%s178 + $0xa0] sm:$0xff] %v474
        %510 = vst.msk [vmem:[%s178 + $0xa8] sm:$0xff] %vm489, %v475
        %511 = vst [vmem:[%s178 + $0xb0] sm:$0xff] %v476
        %512 = vst.msk [vmem:[%s178 + $0xb8] sm:$0xff] %vm489, %v477
        %513 = vst [vmem:[%s178 + $0xc0] sm:$0xff] %v478
        %514 = vst.msk [vmem:[%s178 + $0xc8] sm:$0xff] %vm489, %v479
        %515 = vst [vmem:[%s178 + $0xd0] sm:$0xff] %v480
        %516 = vst.msk [vmem:[%s178 + $0xd8] sm:$0xff] %vm489, %v481
        %517 = vst [vmem:[%s178 + $0xe0] sm:$0xff] %v482
        %518 = vst.msk [vmem:[%s178 + $0xe8] sm:$0xff] %vm489, %v483
        %519 = vst [vmem:[%s178 + $0xf0] sm:$0xff] %v484
        %520 = vst.msk [vmem:[%s178 + $0xf8] sm:$0xff] %vm489, %v485
        %521 = vst [vmem:[%s178 + $0x100] sm:$0xff] %v486
        %522 = vst.msk [vmem:[%s178 + $0x108] sm:$0xff] %vm489, %v487
        %s523 = sand.u32 %s73, 1
        %s524 = sand.u32 %s73, 1
        %s525 = smul.addr %s524, 272
        %s526 = scalar_lea.vmem [#allocation2], %s525
        // Predicated region
        $region29: #{tpu_custom_call.1} parent=27 // pred_check
          %p527 = pneg %p83
        $region30: #{tpu_custom_call.1} parent=27 // pred_check_branch
          %529 = sbr.rel (%p527) target = $region32
        $region31: #{tpu_custom_call.1} parent=27 // pred_region
          %s530 = smul.u32 17, %s13
          %s531 = ssub.s32 132, %s530
          %p532 = scmp.lt.s32.totalorder %s531, 17
          %s533 = scalar_select %p532, %s531, 17
          %s534 = smul.u32 128, %s533
          %s535 = smul.u32 %s534, 2
          %p536 = scmp.ne.s32.totalorder 0, %s535
          %s537 = smul.addr %s530, 2
          %s538 = smul.addr %s537, 8
          %s539 = scalar_lea.vmem %s2, %s538
          // Predicated region
          $region33: #{tpu_custom_call.1} parent=31 // pred_check
            %p540 = pneg %p536
          $region34: #{tpu_custom_call.1} parent=31 // pred_check_branch
            %542 = sbr.rel (%p540) target = $region36
          $region35: #{tpu_custom_call.1} parent=31 // pred_region
            // Predicated region
            $region37: #{tpu_custom_call.1} parent=35 // pred_check
              _
            $region38: #{tpu_custom_call.1} parent=35 // pred_check_branch
              %544 = sbr.rel (0) target = $region40
            $region39: #{tpu_custom_call.1} parent=35 // pred_region
              %s545 = sdiv.u32.pop %s533, 17
              %s546 = srem.u32.pop %s533, 17
              // While loop
              $region41: #{tpu_custom_call.1} parent=39 // loop_pre_header
                _
              $region42: #{tpu_custom_call.1} parent=39 // loop_header
                %s548 = sphi 0, %s550
                %p549 = scmp.ge.s32.totalorder %s548, %s545
                %s553 = sphi 0, %s626
                %s554 = sphi %s526, %s629
                %s555 = sphi %s539, %s630
              $region43: #{tpu_custom_call.1} parent=39 // loop_header_branch
                %552 = sbr.rel (%p549) target = $region47
              $region44: #{tpu_custom_call.1} parent=39 // loop_body
                %v556 = vld [vmem:[%s554] sm:$0xff]
                %557 = vst [vmem:[%s555] sm:$0xff] %v556
                %v558 = vld [vmem:[%s554 + $0x10] sm:$0xff]
                %559 = vst [vmem:[%s555 + $0x10] sm:$0xff] %v558
                %v560 = vld [vmem:[%s554 + $0x20] sm:$0xff]
                %561 = vst [vmem:[%s555 + $0x20] sm:$0xff] %v560
                %v562 = vld [vmem:[%s554 + $0x30] sm:$0xff]
                %563 = vst [vmem:[%s555 + $0x30] sm:$0xff] %v562
                %v564 = vld [vmem:[%s554 + $0x40] sm:$0xff]
                %565 = vst [vmem:[%s555 + $0x40] sm:$0xff] %v564
                %v566 = vld [vmem:[%s554 + $0x50] sm:$0xff]
                %567 = vst [vmem:[%s555 + $0x50] sm:$0xff] %v566
                %v568 = vld [vmem:[%s554 + $0x60] sm:$0xff]
                %569 = vst [vmem:[%s555 + $0x60] sm:$0xff] %v568
                %v570 = vld [vmem:[%s554 + $0x70] sm:$0xff]
                %571 = vst [vmem:[%s555 + $0x70] sm:$0xff] %v570
                %v572 = vld [vmem:[%s554 + $0x80] sm:$0xff]
                %573 = vst [vmem:[%s555 + $0x80] sm:$0xff] %v572
                %v574 = vld [vmem:[%s554 + $0x90] sm:$0xff]
                %575 = vst [vmem:[%s555 + $0x90] sm:$0xff] %v574
                %v576 = vld [vmem:[%s554 + $0xa0] sm:$0xff]
                %577 = vst [vmem:[%s555 + $0xa0] sm:$0xff] %v576
                %v578 = vld [vmem:[%s554 + $0xb0] sm:$0xff]
                %579 = vst [vmem:[%s555 + $0xb0] sm:$0xff] %v578
                %v580 = vld [vmem:[%s554 + $0xc0] sm:$0xff]
                %581 = vst [vmem:[%s555 + $0xc0] sm:$0xff] %v580
                %v582 = vld [vmem:[%s554 + $0xd0] sm:$0xff]
                %583 = vst [vmem:[%s555 + $0xd0] sm:$0xff] %v582
                %v584 = vld [vmem:[%s554 + $0xe0] sm:$0xff]
                %585 = vst [vmem:[%s555 + $0xe0] sm:$0xff] %v584
                %v586 = vld [vmem:[%s554 + $0xf0] sm:$0xff]
                %587 = vst [vmem:[%s555 + $0xf0] sm:$0xff] %v586
                %v588 = vld [vmem:[%s554 + $0x100] sm:$0xff]
                %589 = vst [vmem:[%s555 + $0x100] sm:$0xff] %v588
                %v590 = vld [vmem:[%s554 + $0x8] sm:$0xff]
                %591 = vst [vmem:[%s555 + $0x8] sm:$0xff] %v590
                %v592 = vld [vmem:[%s554 + $0x18] sm:$0xff]
                %593 = vst [vmem:[%s555 + $0x18] sm:$0xff] %v592
                %v594 = vld [vmem:[%s554 + $0x28] sm:$0xff]
                %595 = vst [vmem:[%s555 + $0x28] sm:$0xff] %v594
                %v596 = vld [vmem:[%s554 + $0x38] sm:$0xff]
                %597 = vst [vmem:[%s555 + $0x38] sm:$0xff] %v596
                %v598 = vld [vmem:[%s554 + $0x48] sm:$0xff]
                %599 = vst [vmem:[%s555 + $0x48] sm:$0xff] %v598
                %v600 = vld [vmem:[%s554 + $0x58] sm:$0xff]
                %601 = vst [vmem:[%s555 + $0x58] sm:$0xff] %v600
                %v602 = vld [vmem:[%s554 + $0x68] sm:$0xff]
                %603 = vst [vmem:[%s555 + $0x68] sm:$0xff] %v602
                %v604 = vld [vmem:[%s554 + $0x78] sm:$0xff]
                %605 = vst [vmem:[%s555 + $0x78] sm:$0xff] %v604
                %v606 = vld [vmem:[%s554 + $0x88] sm:$0xff]
                %607 = vst [vmem:[%s555 + $0x88] sm:$0xff] %v606
                %v608 = vld [vmem:[%s554 + $0x98] sm:$0xff]
                %609 = vst [vmem:[%s555 + $0x98] sm:$0xff] %v608
                %v610 = vld [vmem:[%s554 + $0xa8] sm:$0xff]
                %611 = vst [vmem:[%s555 + $0xa8] sm:$0xff] %v610
                %v612 = vld [vmem:[%s554 + $0xb8] sm:$0xff]
                %613 = vst [vmem:[%s555 + $0xb8] sm:$0xff] %v612
                %v614 = vld [vmem:[%s554 + $0xc8] sm:$0xff]
                %615 = vst [vmem:[%s555 + $0xc8] sm:$0xff] %v614
                %v616 = vld [vmem:[%s554 + $0xd8] sm:$0xff]
                %617 = vst [vmem:[%s555 + $0xd8] sm:$0xff] %v616
                %v618 = vld [vmem:[%s554 + $0xe8] sm:$0xff]
                %619 = vst [vmem:[%s555 + $0xe8] sm:$0xff] %v618
                %v620 = vld [vmem:[%s554 + $0xf8] sm:$0xff]
                %621 = vst [vmem:[%s555 + $0xf8] sm:$0xff] %v620
                %v622 = vld [vmem:[%s554 + $0x108] sm:$0xff]
                %623 = vst [vmem:[%s555 + $0x108] sm:$0xff] %v622
                %s624 = sadd.s32 1, %s553
                %p625 = scmp.ge.s32.totalorder %s624, %s545
                %s626 = scalar_select %p625, 0, %s624
                %s627 = smul.u32 %s626, 272
                %s628 = smul.u32 %s626, 272
                %s629 = scalar_lea.vmem %s526, %s627 [#allocation2]
                %s630 = scalar_lea.vmem %s539, %s628
              $region45: #{tpu_custom_call.1} parent=39 // loop_footer
                %s550 = sadd.s32 %s548, 1
              $region46: #{tpu_custom_call.1} parent=39 // loop_footer_branch
                %547 = sbr.rel target = $region42
              $region47: #{tpu_custom_call.1} parent=39 // loop_exit
                _
              %s631 = sdiv.u32.pop %s533, 17
              %s632 = srem.u32.pop %s533, 17
              %s633 = smul.u32 %s631, 17
              %s634 = smul.u32 16, %s633
              %s635 = scalar_lea.vmem %s526, %s634 [#allocation2]
              %s636 = smul.u32 16, %s633
              %s637 = scalar_lea.vmem %s539, %s636
              // While loop
              $region48: #{tpu_custom_call.1} parent=39 // loop_pre_header
                _
              $region49: #{tpu_custom_call.1} parent=39 // loop_header
                %s639 = sphi 0, %s641
                %p640 = scmp.ge.s32.totalorder %s639, %s632
                %s644 = sphi 0, %s653
                %s645 = sphi %s635, %s656
                %s646 = sphi %s637, %s657
              $region50: #{tpu_custom_call.1} parent=39 // loop_header_branch
                %643 = sbr.rel (%p640) target = $region54
              $region51: #{tpu_custom_call.1} parent=39 // loop_body
                %v647 = vld [vmem:[%s645] sm:$0xff]
                %648 = vst [vmem:[%s646] sm:$0xff] %v647
                %v649 = vld [vmem:[%s645 + $0x8] sm:$0xff]
                %650 = vst [vmem:[%s646 + $0x8] sm:$0xff] %v649
                %s651 = sadd.s32 1, %s644
                %p652 = scmp.ge.s32.totalorder %s651, %s632
                %s653 = scalar_select %p652, 0, %s651
                %s654 = smul.u32 %s653, 16
                %s655 = smul.u32 %s653, 16
                %s656 = scalar_lea.vmem %s635, %s654 [#allocation2]
                %s657 = scalar_lea.vmem %s637, %s655
              $region52: #{tpu_custom_call.1} parent=39 // loop_footer
                %s641 = sadd.s32 %s639, 1
              $region53: #{tpu_custom_call.1} parent=39 // loop_footer_branch
                %638 = sbr.rel target = $region49
              $region54: #{tpu_custom_call.1} parent=39 // loop_exit
                _
            $region40: #{tpu_custom_call.1} parent=35 // pred_fallthru
              _
            // Predicated region
            $region55: #{tpu_custom_call.1} parent=35 // pred_check
              _
            $region56: #{tpu_custom_call.1} parent=35 // pred_check_branch
              %659 = sbr.rel target = $region58
            $region57: #{tpu_custom_call.1} parent=35 // pred_region
              _
            $region58: #{tpu_custom_call.1} parent=35 // pred_fallthru
              _
          $region36: #{tpu_custom_call.1} parent=31 // pred_fallthru
            _
          %660 = vnop
        $region32: #{tpu_custom_call.1} parent=27 // pred_fallthru
          _
      $region28: #{tpu_custom_call.1} parent=5 // pred_fallthru
        _
      %p661 = scmp.le.s32.totalorder 2, %s8
      // Predicated region
      $region59: #{tpu_custom_call.1} parent=5 // pred_check
        %p662 = pneg %p661
      $region60: #{tpu_custom_call.1} parent=5 // pred_check_branch
        %664 = sbr.rel (%p662) target = $region62
      $region61: #{tpu_custom_call.1} parent=5 // pred_region
        %s665 = ssub.s32 %s8, 2
        // Predicated region
        $region63: #{tpu_custom_call.1} parent=61 // pred_check
          %p666 = pneg %p89
        $region64: #{tpu_custom_call.1} parent=61 // pred_check_branch
          %668 = sbr.rel (%p666) target = $region66
        $region65: #{tpu_custom_call.1} parent=61 // pred_region
          %s669 = sand.u32 %s74, 1
          %s670 = sand.u32 %s74, 1
          %s671 = smul.addr %s670, 272
          %s672 = scalar_lea.vmem [#allocation2], %s671
        $region66: #{tpu_custom_call.1} parent=61 // pred_fallthru
          _
      $region62: #{tpu_custom_call.1} parent=5 // pred_fallthru
        _
    $region6: #{tpu_custom_call.1} parent=1 // loop_footer
      %s12 = sadd.s32 1, %s8
    $region7: #{tpu_custom_call.1} parent=1 // loop_footer_branch
      %7 = sbr.rel target = $region3
    $region8: #{tpu_custom_call.1} parent=1 // loop_exit
      _

</llo_original>
